<compile_context>
chip_gen: v5e
topology: v5e:2x2
jax: 0.10.0
libtpu: 0.0.40
codegen_flags: <defaults>
</compile_context>

<pallas_src>
import jax
import jax.numpy as jnp
from jax.experimental import pallas as pl
from jax.experimental.pallas import tpu as pltpu


def sam_kernel(x_ref, wa_ref, wm_ref, b_ref, o_ref):
    # x_ref:  (C, bt, L*K)  channel-major, lane-dense input block (native dtype)
    # wa_ref: (L*K, L*K)    block-diagonal weight, channel-mean branch (f32)
    # wm_ref: (L*K, L*K)    block-diagonal weight, channel-max branch (f32)
    # b_ref:  (1, L*K)      conv bias tiled over L (f32)
    # o_ref:  (C, bt, L*K)
    C = x_ref.shape[0]

    # Channel mean (f32 accumulation) and channel max (native dtype) without
    # materializing an f32 copy of the whole block.
    x0 = x_ref[0]                                     # (bt, LK)
    acc = x0.astype(jnp.float32)
    mx = x0
    for c in range(1, C):
        xc = x_ref[c]
        acc = acc + xc.astype(jnp.float32)
        mx = jnp.maximum(mx, xc)
    avg = acc * (1.0 / C)                             # == torch.mean(x, dim=1)

    # Conv2d(2, K, (1, K)) over all bt*L locations as two lane-dense MXU matmuls.
    pre = (jnp.dot(avg, wa_ref[...], preferred_element_type=jnp.float32)
           + jnp.dot(mx.astype(jnp.float32), wm_ref[...],
                     preferred_element_type=jnp.float32)
           + b_ref[...])                              # (bt, LK)

    # sigmoid = 1 / (1 + exp(-pre)): exp on the EUP, approx reciprocal on the EUP.
    attn = pl.reciprocal(1.0 + jnp.exp(-pre), approx=True)

    # rearrange('b c l -> b 1 l c') + residual: out = attn * x + x, broadcast over C.
    scale = (attn + 1.0).astype(o_ref.dtype)          # small (bt, LK) cast only
    o_ref[...] = x_ref[...] * scale[None, :, :]


def _pick_batch_tile(batch, bytes_per_b, target_bytes, *, min_steps=4, sublane=8):
    """Return (bt, padded_batch, steps).

    bt is a multiple of 8 whenever the batch axis is tiled (sublane-dense minor tile),
    blocks target ~target_bytes, and we keep >= min_steps grid steps (even preferred,
    so both v7x TensorCores stay busy and DMA overlaps) when the batch allows.  Awkward
    batch sizes are handled by zero-padding up to steps*bt instead of shrinking to 1."""
    if batch <= sublane:
        return batch, batch, 1                       # single full-dim block
    bt = max(1, int(target_bytes // max(bytes_per_b, 1)))
    bt = min(bt, batch)
    if batch >= min_steps * sublane:
        bt = min(bt, -(-batch // min_steps))         # keep >= min_steps steps
    bt = max(sublane, (bt // sublane) * sublane)     # 8-aligned batch tile
    steps = -(-batch // bt)
    if steps > 1 and steps % 2 == 1:                 # prefer an even step count
        alt = -(-batch // (steps + 1))
        alt = max(sublane, ((alt + sublane - 1) // sublane) * sublane)
        if -(-batch // alt) % 2 == 0:
            bt = alt
            steps = -(-batch // alt)
    return bt, steps * bt, steps


def spatial_attention_v1(x, conv_w, conv_b, *, target_block_bytes=8 << 20):
    """x: (B, C, L, K); conv_w: (K, 2, 1, K) PyTorch Conv2d weight; conv_b: (K,)."""
    B, C, L, K = x.shape
    LK = L * K

    # Channel-major, lane-dense layout: (B, C, L, K) -> (C, B, L*K).
    x_cm = jnp.transpose(x.reshape(B, C, LK), (1, 0, 2))

    # Fold Conv2d(2, K, (1, K)) into two block-diagonal (LK, LK) maps + tiled bias:
    #   pre[b, l*K + k] = sum_j avg[b, l*K + j] * W[k,0,0,j]
    #                   + sum_j  mx[b, l*K + j] * W[k,1,0,j] + bias[k]
    wa = conv_w[:, 0, 0, :].astype(jnp.float32).T     # (K, K): wa[j, k] = W[k,0,0,j]
    wm = conv_w[:, 1, 0, :].astype(jnp.float32).T
    eye_l = jnp.eye(L, dtype=jnp.float32)
    wa_bd = jnp.kron(eye_l, wa)                       # (LK, LK), 83 KB at L=16
    wm_bd = jnp.kron(eye_l, wm)
    b_row = jnp.tile(conv_b.astype(jnp.float32), L).reshape(1, LK)
    weight_bytes = 2 * LK * LK * 4 + LK * 4

    # Per-generation VMEM cap: ~70% of physical (≈45 MiB on v7x, 64 MiB on v5e/v6e).
    try:
        info = pltpu.get_tpu_info()
        phys_vmem = int(getattr(info, "vmem_capacity_bytes", 128 << 20))
    except Exception:
        phys_vmem = 128 << 20
    vmem_cap = min(int(phys_vmem * 0.70), 64 << 20)

    # Batch-tile sizing from the cap: double-buffered in+out (4x block) + weights + headroom.
    bytes_per_b = C * LK * x.dtype.itemsize
    max_block = max(bytes_per_b, (vmem_cap - weight_bytes - (6 << 20)) // 4)
    bt, b_pad, steps = _pick_batch_tile(B, bytes_per_b, min(target_block_bytes, max_block))

    if b_pad != B:
        x_cm = jnp.pad(x_cm, ((0, 0), (0, b_pad - B), (0, 0)))

    block_bytes = bt * bytes_per_b
    vmem_limit = int(min(vmem_cap,
                         max(32 << 20, 4 * block_bytes + weight_bytes + (4 << 20))))

    out_cm = pl.pallas_call(
        sam_kernel,
        out_shape=jax.ShapeDtypeStruct((C, b_pad, LK), x.dtype),
        grid=(steps,),
        in_specs=[
            pl.BlockSpec((C, bt, LK), lambda i: (0, i, 0)),
            pl.BlockSpec((LK, LK), lambda i: (0, 0)),
            pl.BlockSpec((LK, LK), lambda i: (0, 0)),
            pl.BlockSpec((1, LK), lambda i: (0, 0)),
        ],
        out_specs=pl.BlockSpec((C, bt, LK), lambda i: (0, i, 0)),
        compiler_params=pltpu.CompilerParams(
            dimension_semantics=("parallel",),
            vmem_limit_bytes=vmem_limit,
        ),
    )(x_cm, wa_bd, wm_bd, b_row)

    # Back to the PyTorch layout (B, C, L, K); drop batch padding.
    return jnp.transpose(out_cm[:, :B, :], (1, 0, 2)).reshape(B, C, L, K)


if __name__ == "__main__":
    B, C, L, K = 2, 4, 16, 9

    key = jax.random.PRNGKey(0)
    kx, kw, kb = jax.random.split(key, 3)

    x = jax.random.normal(kx, (B, C, L, K), dtype=jnp.float32)

    # Deterministic Conv2d(2, K, (1, K)) params, PyTorch-default-style uniform init.
    fan_in = 2 * K
    bound = (1.0 / fan_in) ** 0.5
    conv_w = jax.random.uniform(kw, (K, 2, 1, K), minval=-bound, maxval=bound,
                                dtype=jnp.float32)
    conv_b = jax.random.uniform(kb, (K,), minval=-bound, maxval=bound, dtype=jnp.float32)

    out = jax.block_until_ready(spatial_attention_v1(x, conv_w, conv_b))

    # Pure-JAX reference of the PyTorch forward.
    avg = jnp.mean(x, axis=1, keepdims=True)
    mx = jnp.max(x, axis=1, keepdims=True)
    cat = jnp.concatenate([avg, mx], axis=1)                               # (B, 2, L, K)
    conv_out = jnp.einsum('bilj,kij->bkl', cat, conv_w[:, :, 0, :]) \
        + conv_b[None, :, None]                                            # (B, K, L)
    attn = jax.nn.sigmoid(conv_out)
    attn = jnp.transpose(attn, (0, 2, 1))[:, None, :, :]                   # (B, 1, L, K)
    ref = attn * x + x

    # Tolerance loosened (vs 1e-5) solely because the kernel uses the approximate EUP
    # reciprocal for the sigmoid; all other math is f32.
    assert jnp.allclose(out, ref, rtol=5e-3, atol=5e-3), "mismatch vs reference"
    print("KERNEL_OK")
</pallas_src>

<mosaic_0001>
module attributes {stable_mosaic.version = 11 : i64} {
  func.func @sam_kernel(%arg0: i32, %arg1: memref<4x2x144xf32, #tpu.memory_space<vmem>>, %arg2: memref<144x144xf32, #tpu.memory_space<vmem>>, %arg3: memref<144x144xf32, #tpu.memory_space<vmem>>, %arg4: memref<1x144xf32, #tpu.memory_space<vmem>>, %arg5: memref<4x2x144xf32, #tpu.memory_space<vmem>>) attributes {dimension_semantics = [#tpu.dimension_semantics<parallel>], iteration_bounds = array<i64: 1>, scalar_prefetch = 0 : i64, scratch_operands = 0 : i64, tpu.core_type = #tpu.core_type<tc>, window_params = [{transform_indices = @transform_0, window_bounds = array<i64: 4, 2, 144>}, {pipeline_mode = #tpu.pipeline_mode<synchronous>, transform_indices = @transform_1, window_bounds = array<i64: 144, 144>}, {pipeline_mode = #tpu.pipeline_mode<synchronous>, transform_indices = @transform_2, window_bounds = array<i64: 144, 144>}, {pipeline_mode = #tpu.pipeline_mode<synchronous>, transform_indices = @transform_3, window_bounds = array<i64: 1, 144>}, {transform_indices = @transform_4, window_bounds = array<i64: 4, 2, 144>}]} {
    %c0 = arith.constant 0 : index
    %c0_0 = arith.constant 0 : index
    %c0_1 = arith.constant 0 : index
    %0 = vector.load %arg1[%c0, %c0_0, %c0_1] : memref<4x2x144xf32, #tpu.memory_space<vmem>>, vector<1x2x144xf32>
    %1 = vector.shape_cast %0 : vector<1x2x144xf32> to vector<2x144xf32>
    %c1 = arith.constant 1 : index
    %c0_2 = arith.constant 0 : index
    %c0_3 = arith.constant 0 : index
    %2 = vector.load %arg1[%c1, %c0_2, %c0_3] : memref<4x2x144xf32, #tpu.memory_space<vmem>>, vector<1x2x144xf32>
    %3 = vector.shape_cast %2 : vector<1x2x144xf32> to vector<2x144xf32>
    %4 = arith.addf %1, %3 : vector<2x144xf32>
    %5 = arith.maximumf %1, %3 : vector<2x144xf32>
    %c2 = arith.constant 2 : index
    %c0_4 = arith.constant 0 : index
    %c0_5 = arith.constant 0 : index
    %6 = vector.load %arg1[%c2, %c0_4, %c0_5] : memref<4x2x144xf32, #tpu.memory_space<vmem>>, vector<1x2x144xf32>
    %7 = vector.shape_cast %6 : vector<1x2x144xf32> to vector<2x144xf32>
    %8 = arith.addf %4, %7 : vector<2x144xf32>
    %9 = arith.maximumf %5, %7 : vector<2x144xf32>
    %c3 = arith.constant 3 : index
    %c0_6 = arith.constant 0 : index
    %c0_7 = arith.constant 0 : index
    %10 = vector.load %arg1[%c3, %c0_6, %c0_7] : memref<4x2x144xf32, #tpu.memory_space<vmem>>, vector<1x2x144xf32>
    %11 = vector.shape_cast %10 : vector<1x2x144xf32> to vector<2x144xf32>
    %12 = arith.addf %8, %11 : vector<2x144xf32>
    %13 = arith.maximumf %9, %11 : vector<2x144xf32>
    %cst = arith.constant 2.500000e-01 : f32
    %14 = vector.broadcast %cst : f32 to vector<2x144xf32>
    %15 = arith.mulf %12, %14 : vector<2x144xf32>
    %c0_8 = arith.constant 0 : index
    %c0_9 = arith.constant 0 : index
    %16 = vector.load %arg2[%c0_8, %c0_9] : memref<144x144xf32, #tpu.memory_space<vmem>>, vector<144x144xf32>
    %cst_10 = arith.constant dense<0.000000e+00> : vector<2x144xf32>
    %17 = tpu.matmul %15, %16, %cst_10 {dimension_numbers = #tpu.dot_dimension_numbers<[1], [0], [0], [1], [0, 0, 1, 1], [], []>} : vector<2x144xf32>, vector<144x144xf32>, vector<2x144xf32> -> vector<2x144xf32>
    %c0_11 = arith.constant 0 : index
    %c0_12 = arith.constant 0 : index
    %18 = vector.load %arg3[%c0_11, %c0_12] : memref<144x144xf32, #tpu.memory_space<vmem>>, vector<144x144xf32>
    %cst_13 = arith.constant dense<0.000000e+00> : vector<2x144xf32>
    %19 = tpu.matmul %13, %18, %cst_13 {dimension_numbers = #tpu.dot_dimension_numbers<[1], [0], [0], [1], [0, 0, 1, 1], [], []>} : vector<2x144xf32>, vector<144x144xf32>, vector<2x144xf32> -> vector<2x144xf32>
    %20 = arith.addf %17, %19 : vector<2x144xf32>
    %c0_14 = arith.constant 0 : index
    %c0_15 = arith.constant 0 : index
    %21 = vector.load %arg4[%c0_14, %c0_15] : memref<1x144xf32, #tpu.memory_space<vmem>>, vector<1x144xf32>
    %22 = vector.broadcast %21 : vector<1x144xf32> to vector<2x144xf32>
    %23 = arith.addf %20, %22 : vector<2x144xf32>
    %cst_16 = arith.constant 0.000000e+00 : f32
    %24 = vector.broadcast %cst_16 : f32 to vector<2x144xf32>
    %25 = arith.subf %24, %23 : vector<2x144xf32>
    %26 = math.exp %25 : vector<2x144xf32>
    %cst_17 = arith.constant 1.000000e+00 : f32
    %27 = vector.broadcast %cst_17 : f32 to vector<2x144xf32>
    %28 = arith.addf %27, %26 : vector<2x144xf32>
    %29 = tpu.reciprocal %28 {approx = true} : vector<2x144xf32> -> vector<2x144xf32>
    %cst_18 = arith.constant 1.000000e+00 : f32
    %30 = vector.broadcast %cst_18 : f32 to vector<2x144xf32>
    %31 = arith.addf %29, %30 : vector<2x144xf32>
    %c0_19 = arith.constant 0 : index
    %c0_20 = arith.constant 0 : index
    %c0_21 = arith.constant 0 : index
    %32 = vector.load %arg1[%c0_19, %c0_20, %c0_21] : memref<4x2x144xf32, #tpu.memory_space<vmem>>, vector<4x2x144xf32>
    %33 = vector.shape_cast %31 : vector<2x144xf32> to vector<1x2x144xf32>
    %34 = vector.broadcast %33 : vector<1x2x144xf32> to vector<4x2x144xf32>
    %35 = arith.mulf %32, %34 : vector<4x2x144xf32>
    %c0_22 = arith.constant 0 : index
    %c0_23 = arith.constant 0 : index
    %c0_24 = arith.constant 0 : index
    %36 = vector.load %arg5[%c0_22, %c0_23, %c0_24] : memref<4x2x144xf32, #tpu.memory_space<vmem>>, vector<4x2x144xf32>
    tpu.vector_store %arg5[%c0_22, %c0_23, %c0_24], %35 {strides = array<i32>} : memref<4x2x144xf32, #tpu.memory_space<vmem>>, vector<4x2x144xf32>,
    return
  }
  func.func @transform_0(%arg0: i32) -> (i32, i32, i32) {
    %c0_i32 = arith.constant 0 : i32
    %c0_i32_0 = arith.constant 0 : i32
    %c0_i32_1 = arith.constant 0 : i32
    return %c0_i32, %arg0, %c0_i32_0 : i32, i32, i32
  }
  func.func @transform_1(%arg0: i32) -> (i32, i32) {
    %c0_i32 = arith.constant 0 : i32
    %c0_i32_0 = arith.constant 0 : i32
    %c0_i32_1 = arith.constant 0 : i32
    return %c0_i32, %c0_i32_0 : i32, i32
  }
  func.func @transform_2(%arg0: i32) -> (i32, i32) {
    %c0_i32 = arith.constant 0 : i32
    %c0_i32_0 = arith.constant 0 : i32
    %c0_i32_1 = arith.constant 0 : i32
    return %c0_i32, %c0_i32_0 : i32, i32
  }
  func.func @transform_3(%arg0: i32) -> (i32, i32) {
    %c0_i32 = arith.constant 0 : i32
    %c0_i32_0 = arith.constant 0 : i32
    %c0_i32_1 = arith.constant 0 : i32
    return %c0_i32, %c0_i32_0 : i32, i32
  }
  func.func @transform_4(%arg0: i32) -> (i32, i32, i32) {
    %c0_i32 = arith.constant 0 : i32
    %c0_i32_0 = arith.constant 0 : i32
    %c0_i32_1 = arith.constant 0 : i32
    return %c0_i32, %arg0, %c0_i32_0 : i32, i32, i32
  }
}

</mosaic_0001>

<llo_original>
// kernel: tpu_custom_call.1
$region0: #{tpu_custom_call.1}
  #allocation0 [shape = 'u32[]', space=smem, size = 0x4, offset = 0x4, fixed_abs, tag = 'smem constant byte address 0x4 - core index']
  #allocation1 [shape = 'u32[72,128]{1,0:T(1,128)}', space=vmem, size = 0x9000, scoped, tag = 'internal scratch']
  %s0 = inlined_call_operand.hbm [shape: f32[4,2,144], index: 0, kind: input, shape index: {}]
  %s1 = inlined_call_operand.hbm [shape: f32[144,144], index: 1, kind: input, shape index: {}]
  %s2 = inlined_call_operand.hbm [shape: f32[144,144], index: 2, kind: input, shape index: {}]
  %s3 = inlined_call_operand.vmem [shape: f32[1,144], index: 3, kind: input, shape index: {}]
  %s4 = inlined_call_operand.hbm [shape: f32[4,2,144], index: 4, kind: output, shape index: {}]
  %s5 = sld [smem:[#allocation0]]
  $region38: #{tpu_custom_call.1} parent=0
    _
  %s7 = ssub.s32 1, %s5
  %s8 = scalar_select 0, %s7, %s5
  $region1: #{tpu_custom_call.1} parent=0
    #allocation2 [shape = 'u8[8192]{0}', space=vmem, size = 0x2000, scoped, tag = 'input window, operand 0, single buffered']
    #allocation3 [shape = 's32[1]{0}', space=sflag, size = 0x4, scoped, tag = 'scoped memory for tpu_custom_call.1']
    #allocation4 [shape = 's32[1]{0}', space=sflag, size = 0x4, scoped, tag = 'scoped memory for tpu_custom_call.1']
    #allocation5 [shape = 'u8[147456]{0}', space=vmem, size = 0x24000, scoped, tag = 'input window, operand 1, single buffered']
    #allocation6 [shape = 's32[1]{0}', space=sflag, size = 0x4, scoped, tag = 'scoped memory for tpu_custom_call.1']
    #allocation7 [shape = 'u8[147456]{0}', space=vmem, size = 0x24000, scoped, tag = 'input window, operand 2, single buffered']
    #allocation8 [shape = 'u8[8192]{0}', space=vmem, size = 0x2000, scoped, tag = 'output window, operand 0, single buffered']
    %9 = vsyncpa [#allocation3], 0
    %10 = vsyncpa [#allocation6], 0
    %11 = vsyncpa [#allocation4], 0
    // Predicated region
    $region2: #{tpu_custom_call.1} parent=1 // pred_check
      _
    $region3: #{tpu_custom_call.1} parent=1 // pred_check_branch
      %13 = sbr.rel (0) target = $region5
    $region4: #{tpu_custom_call.1} parent=1 // pred_region
      %15 = vsyncadd [#allocation3], 0
      %s16 = sshll.u32 %s0, 4
      %s17 = int_to_ptr.hbm [resolvable:$true] %s16
      %s18 = sshll.u32 [#allocation2], 4
      %s19 = int_to_ptr.vmem [resolvable:$true] %s18
      %24 = dma.hbm_to_vmem [thread:$0]  %s17, 256, %s19, [#allocation3], 64, 64, 4
    $region5: #{tpu_custom_call.1} parent=1 // pred_fallthru
      _
    // Predicated region
    $region6: #{tpu_custom_call.1} parent=1 // pred_check
      _
    $region7: #{tpu_custom_call.1} parent=1 // pred_check_branch
      %26 = sbr.rel (0) target = $region9
    $region8: #{tpu_custom_call.1} parent=1 // pred_region
      %28 = vsyncadd [#allocation6], 0
      %s29 = sshll.u32 %s1, 4
      %s30 = int_to_ptr.hbm [resolvable:$true] %s29
      %s31 = sshll.u32 [#allocation5], 4
      %s32 = int_to_ptr.vmem [resolvable:$true] %s31
      %37 = dma.hbm_to_vmem [thread:$0]  %s30, 4608, %s32, [#allocation6], 256, 256, 16
    $region9: #{tpu_custom_call.1} parent=1 // pred_fallthru
      _
    // Predicated region
    $region10: #{tpu_custom_call.1} parent=1 // pred_check
      _
    $region11: #{tpu_custom_call.1} parent=1 // pred_check_branch
      %39 = sbr.rel (0) target = $region13
    $region12: #{tpu_custom_call.1} parent=1 // pred_region
      %41 = vsyncadd [#allocation6], 0
      %s42 = sshll.u32 %s2, 4
      %s43 = int_to_ptr.hbm [resolvable:$true] %s42
      %s44 = sshll.u32 [#allocation7], 4
      %s45 = int_to_ptr.vmem [resolvable:$true] %s44
      %50 = dma.hbm_to_vmem [thread:$0]  %s43, 4608, %s45, [#allocation6], 256, 256, 16
    $region13: #{tpu_custom_call.1} parent=1 // pred_fallthru
      _
    // Predicated region
    $region14: #{tpu_custom_call.1} parent=1 // pred_check
      _
    $region15: #{tpu_custom_call.1} parent=1 // pred_check_branch
      %52 = sbr.rel (0) target = $region17
    $region16: #{tpu_custom_call.1} parent=1 // pred_region
      _
    $region17: #{tpu_custom_call.1} parent=1 // pred_fallthru
      _
    // Predicated region
    $region18: #{tpu_custom_call.1} parent=1 // pred_check
      _
    $region19: #{tpu_custom_call.1} parent=1 // pred_check_branch
      %54 = sbr.rel (0) target = $region21
    $region20: #{tpu_custom_call.1} parent=1 // pred_region
      %56 = dma.done [#allocation3], 256
    $region21: #{tpu_custom_call.1} parent=1 // pred_fallthru
      _
    // Predicated region
    $region22: #{tpu_custom_call.1} parent=1 // pred_check
      _
    $region23: #{tpu_custom_call.1} parent=1 // pred_check_branch
      %58 = sbr.rel (0) target = $region25
    $region24: #{tpu_custom_call.1} parent=1 // pred_region
      %60 = dma.done [#allocation6], 4608
    $region25: #{tpu_custom_call.1} parent=1 // pred_fallthru
      _
    // Predicated region
    $region26: #{tpu_custom_call.1} parent=1 // pred_check
      _
    $region27: #{tpu_custom_call.1} parent=1 // pred_check_branch
      %62 = sbr.rel (0) target = $region29
    $region28: #{tpu_custom_call.1} parent=1 // pred_region
      %64 = dma.done [#allocation6], 4608
    $region29: #{tpu_custom_call.1} parent=1 // pred_fallthru
      _
    %v65 = vld [vmem:[#allocation2] sm:$0xf]
    %s66 = scalar_lea.vmem [#allocation2], 4
    %v67 = vld [vmem:[%s66] sm:$0xf]
    %v68 = vadd.f32 %v65, %v67
    %v69 = vmax.f32 %v65, %v67
    %s70 = scalar_lea.vmem [#allocation2], 8
    %v71 = vld [vmem:[%s70] sm:$0xf]
    %v72 = vadd.f32 %v68, %v71
    %v73 = vmax.f32 %v69, %v71
    %s74 = scalar_lea.vmem [#allocation2], 12
    %v75 = vld [vmem:[%s74] sm:$0xf]
    %v76 = vadd.f32 %v72, %v75
    %v77 = vmax.f32 %v73, %v75
    %v78 = vmul.f32 %v76, 0.25
    %v79 = vld [vmem:[#allocation5] sm:$0xff]
    %v80 = vld [vmem:[#allocation5 + $0x8] sm:$0xff]
    %v81 = vld [vmem:[#allocation5 + $0x10] sm:$0xff]
    %v82 = vld [vmem:[#allocation5 + $0x18] sm:$0xff]
    %v83 = vld [vmem:[#allocation5 + $0x20] sm:$0xff]
    %v84 = vld [vmem:[#allocation5 + $0x28] sm:$0xff]
    %v85 = vld [vmem:[#allocation5 + $0x30] sm:$0xff]
    %v86 = vld [vmem:[#allocation5 + $0x38] sm:$0xff]
    %v87 = vld [vmem:[#allocation5 + $0x40] sm:$0xff]
    %v88 = vld [vmem:[#allocation5 + $0x48] sm:$0xff]
    %v89 = vld [vmem:[#allocation5 + $0x50] sm:$0xff]
    %v90 = vld [vmem:[#allocation5 + $0x58] sm:$0xff]
    %v91 = vld [vmem:[#allocation5 + $0x60] sm:$0xff]
    %v92 = vld [vmem:[#allocation5 + $0x68] sm:$0xff]
    %v93 = vld [vmem:[#allocation5 + $0x70] sm:$0xff]
    %v94 = vld [vmem:[#allocation5 + $0x78] sm:$0xff]
    %v95 = vld [vmem:[#allocation5 + $0x80] sm:$0xff]
    %v96 = vld [vmem:[#allocation5 + $0x88] sm:$0xff]
    %v97 = vld [vmem:[#allocation5 + $0x90] sm:$0xff]
    %v98 = vld [vmem:[#allocation5 + $0x98] sm:$0xff]
    %v99 = vld [vmem:[#allocation5 + $0xa0] sm:$0xff]
    %v100 = vld [vmem:[#allocation5 + $0xa8] sm:$0xff]
    %v101 = vld [vmem:[#allocation5 + $0xb0] sm:$0xff]
    %v102 = vld [vmem:[#allocation5 + $0xb8] sm:$0xff]
    %v103 = vld [vmem:[#allocation5 + $0xc0] sm:$0xff]
    %v104 = vld [vmem:[#allocation5 + $0xc8] sm:$0xff]
    %v105 = vld [vmem:[#allocation5 + $0xd0] sm:$0xff]
    %v106 = vld [vmem:[#allocation5 + $0xd8] sm:$0xff]
    %v107 = vld [vmem:[#allocation5 + $0xe0] sm:$0xff]
    %v108 = vld [vmem:[#allocation5 + $0xe8] sm:$0xff]
    %v109 = vld [vmem:[#allocation5 + $0xf0] sm:$0xff]
    %v110 = vld [vmem:[#allocation5 + $0xf8] sm:$0xff]
    %v111 = vld [vmem:[#allocation5 + $0x100] sm:$0xff]
    %v112 = vld [vmem:[#allocation5 + $0x108] sm:$0xff]
    %v113 = vld [vmem:[#allocation5 + $0x110] sm:$0xff]
    %v114 = vld [vmem:[#allocation5 + $0x118] sm:$0xff]
    %v115 = vld [vmem:[#allocation7] sm:$0xff]
    %v116 = vld [vmem:[#allocation7 + $0x8] sm:$0xff]
    %v117 = vld [vmem:[#allocation7 + $0x10] sm:$0xff]
    %v118 = vld [vmem:[#allocation7 + $0x18] sm:$0xff]
    %v119 = vld [vmem:[#allocation7 + $0x20] sm:$0xff]
    %v120 = vld [vmem:[#allocation7 + $0x28] sm:$0xff]
    %v121 = vld [vmem:[#allocation7 + $0x30] sm:$0xff]
    %v122 = vld [vmem:[#allocation7 + $0x38] sm:$0xff]
    %v123 = vld [vmem:[#allocation7 + $0x40] sm:$0xff]
    %v124 = vld [vmem:[#allocation7 + $0x48] sm:$0xff]
    %v125 = vld [vmem:[#allocation7 + $0x50] sm:$0xff]
    %v126 = vld [vmem:[#allocation7 + $0x58] sm:$0xff]
    %v127 = vld [vmem:[#allocation7 + $0x60] sm:$0xff]
    %v128 = vld [vmem:[#allocation7 + $0x68] sm:$0xff]
    %v129 = vld [vmem:[#allocation7 + $0x70] sm:$0xff]
    %v130 = vld [vmem:[#allocation7 + $0x78] sm:$0xff]
    %v131 = vld [vmem:[#allocation7 + $0x80] sm:$0xff]
    %v132 = vld [vmem:[#allocation7 + $0x88] sm:$0xff]
    %v133 = vld [vmem:[#allocation7 + $0x90] sm:$0xff]
    %v134 = vld [vmem:[#allocation7 + $0x98] sm:$0xff]
    %v135 = vld [vmem:[#allocation7 + $0xa0] sm:$0xff]
    %v136 = vld [vmem:[#allocation7 + $0xa8] sm:$0xff]
    %v137 = vld [vmem:[#allocation7 + $0xb0] sm:$0xff]
    %v138 = vld [vmem:[#allocation7 + $0xb8] sm:$0xff]
    %v139 = vld [vmem:[#allocation7 + $0xc0] sm:$0xff]
    %v140 = vld [vmem:[#allocation7 + $0xc8] sm:$0xff]
    %v141 = vld [vmem:[#allocation7 + $0xd0] sm:$0xff]
    %v142 = vld [vmem:[#allocation7 + $0xd8] sm:$0xff]
    %v143 = vld [vmem:[#allocation7 + $0xe0] sm:$0xff]
    %v144 = vld [vmem:[#allocation7 + $0xe8] sm:$0xff]
    %v145 = vld [vmem:[#allocation7 + $0xf0] sm:$0xff]
    %v146 = vld [vmem:[#allocation7 + $0xf8] sm:$0xff]
    %v147 = vld [vmem:[#allocation7 + $0x100] sm:$0xff]
    %v148 = vld [vmem:[#allocation7 + $0x108] sm:$0xff]
    %v149 = vld [vmem:[#allocation7 + $0x110] sm:$0xff]
    %v150 = vld [vmem:[#allocation7 + $0x118] sm:$0xff]
    %152 = vst [vmem:[#allocation1] ss:$4 sm:$0xff] %v77
    %v153 = vld.sshfl [vmem:[#allocation1] sm:$0xff pattern:$0x73625140]
    %v154 = vld.sshfl [vmem:[#allocation1 + $0x8] sm:$0xff pattern:$0x73625140]
    %vm156 = vcmask 130048
    %v157 = vsel %vm156, %v154, 0
    %159 = vmatpush.msra.mxu0 %v145
    %160 = vmatpush.msra.mxu0 %v143
    %161 = vmatpush.msra.mxu0 %v141
    %162 = vmatpush.msra.mxu0 %v139
    %163 = vmatpush.msra.mxu0 %v137
    %164 = vmatpush.msra.mxu0 %v135
    %165 = vmatpush.msra.mxu0 %v133
    %166 = vmatpush.msra.mxu0 %v131
    %167 = vmatpush.msra.mxu0 %v129
    %168 = vmatpush.msra.mxu0 %v127
    %169 = vmatpush.msra.mxu0 %v125
    %170 = vmatpush.msra.mxu0 %v123
    %171 = vmatpush.msra.mxu0 %v121
    %172 = vmatpush.msra.mxu0 %v119
    %173 = vmatpush.msra.mxu0 %v117
    %174 = vmatpush.msra.mxu0 %v115
    %175 = vmatmul.f32.gmra.mxu0 %v153
    %v176 = vpop.f32.mrf.mxu0
    %v177 = vadd.f32 0.0, %v176
    %178 = vdwg.mxu0
    %179 = vmatpush.msra.mxu0 0.0
    %180 = vmatpush.msra.mxu0 0.0
    %181 = vmatpush.msra.mxu0 0.0
    %182 = vmatpush.msra.mxu0 0.0
    %183 = vmatpush.msra.mxu0 0.0
    %184 = vmatpush.msra.mxu0 0.0
    %185 = vmatpush.msra.mxu0 0.0
    %186 = vmatpush.msra.mxu0 0.0
    %187 = vmatpush.msra.mxu0 0.0
    %188 = vmatpush.msra.mxu0 0.0
    %189 = vmatpush.msra.mxu0 0.0
    %190 = vmatpush.msra.mxu0 0.0
    %191 = vmatpush.msra.mxu0 0.0
    %192 = vmatpush.msra.mxu0 0.0
    %193 = vmatpush.msra.mxu0 %v149
    %194 = vmatpush.msra.mxu0 %v147
    %195 = vmatmul.f32.gmra.mxu0 %v157
    %v196 = vpop.f32.mrf.mxu0
    %v197 = vadd.f32 %v177, %v196
    %198 = vdwg.mxu0
    %199 = vmatpush.msra.mxu0 %v146
    %200 = vmatpush.msra.mxu0 %v144
    %201 = vmatpush.msra.mxu0 %v142
    %202 = vmatpush.msra.mxu0 %v140
    %203 = vmatpush.msra.mxu0 %v138
    %204 = vmatpush.msra.mxu0 %v136
    %205 = vmatpush.msra.mxu0 %v134
    %206 = vmatpush.msra.mxu0 %v132
    %207 = vmatpush.msra.mxu0 %v130
    %208 = vmatpush.msra.mxu0 %v128
    %209 = vmatpush.msra.mxu0 %v126
    %210 = vmatpush.msra.mxu0 %v124
    %211 = vmatpush.msra.mxu0 %v122
    %212 = vmatpush.msra.mxu0 %v120
    %213 = vmatpush.msra.mxu0 %v118
    %214 = vmatpush.msra.mxu0 %v116
    %215 = vmatmul.f32.gmra.mxu0 %v153
    %v216 = vpop.f32.mrf.mxu0
    %v217 = vadd.f32 0.0, %v216
    %218 = vdwg.mxu0
    %219 = vmatpush.msra.mxu0 0.0
    %220 = vmatpush.msra.mxu0 0.0
    %221 = vmatpush.msra.mxu0 0.0
    %222 = vmatpush.msra.mxu0 0.0
    %223 = vmatpush.msra.mxu0 0.0
    %224 = vmatpush.msra.mxu0 0.0
    %225 = vmatpush.msra.mxu0 0.0
    %226 = vmatpush.msra.mxu0 0.0
    %227 = vmatpush.msra.mxu0 0.0
    %228 = vmatpush.msra.mxu0 0.0
    %229 = vmatpush.msra.mxu0 0.0
    %230 = vmatpush.msra.mxu0 0.0
    %231 = vmatpush.msra.mxu0 0.0
    %232 = vmatpush.msra.mxu0 0.0
    %233 = vmatpush.msra.mxu0 %v150
    %234 = vmatpush.msra.mxu0 %v148
    %235 = vmatmul.f32.gmra.mxu0 %v157
    %v236 = vpop.f32.mrf.mxu0
    %v237 = vadd.f32 %v217, %v236
    %238 = vdwg.mxu0
    %240 = vst [vmem:[#allocation1] ss:$4 sm:$0xff] %v78
    %v241 = vld.sshfl [vmem:[#allocation1] sm:$0xff pattern:$0x73625140]
    %v242 = vld.sshfl [vmem:[#allocation1 + $0x8] sm:$0xff pattern:$0x73625140]
    %v244 = vsel %vm156, %v242, 0
    %246 = vmatpush.msra.mxu0 %v109
    %247 = vmatpush.msra.mxu0 %v107
    %248 = vmatpush.msra.mxu0 %v105
    %249 = vmatpush.msra.mxu0 %v103
    %250 = vmatpush.msra.mxu0 %v101
    %251 = vmatpush.msra.mxu0 %v99
    %252 = vmatpush.msra.mxu0 %v97
    %253 = vmatpush.msra.mxu0 %v95
    %254 = vmatpush.msra.mxu0 %v93
    %255 = vmatpush.msra.mxu0 %v91
    %256 = vmatpush.msra.mxu0 %v89
    %257 = vmatpush.msra.mxu0 %v87
    %258 = vmatpush.msra.mxu0 %v85
    %259 = vmatpush.msra.mxu0 %v83
    %260 = vmatpush.msra.mxu0 %v81
    %261 = vmatpush.msra.mxu0 %v79
    %262 = vmatmul.f32.gmra.mxu0 %v241
    %v263 = vpop.f32.mrf.mxu0
    %v264 = vadd.f32 %v197, %v263
    %265 = vdwg.mxu0
    %266 = vmatpush.msra.mxu0 0.0
    %267 = vmatpush.msra.mxu0 0.0
    %268 = vmatpush.msra.mxu0 0.0
    %269 = vmatpush.msra.mxu0 0.0
    %270 = vmatpush.msra.mxu0 0.0
    %271 = vmatpush.msra.mxu0 0.0
    %272 = vmatpush.msra.mxu0 0.0
    %273 = vmatpush.msra.mxu0 0.0
    %274 = vmatpush.msra.mxu0 0.0
    %275 = vmatpush.msra.mxu0 0.0
    %276 = vmatpush.msra.mxu0 0.0
    %277 = vmatpush.msra.mxu0 0.0
    %278 = vmatpush.msra.mxu0 0.0
    %279 = vmatpush.msra.mxu0 0.0
    %280 = vmatpush.msra.mxu0 %v113
    %281 = vmatpush.msra.mxu0 %v111
    %282 = vmatmul.f32.gmra.mxu0 %v244
    %v283 = vpop.f32.mrf.mxu0
    %v284 = vadd.f32 %v264, %v283
    %285 = vdwg.mxu0
    %286 = vmatpush.msra.mxu0 %v110
    %287 = vmatpush.msra.mxu0 %v108
    %288 = vmatpush.msra.mxu0 %v106
    %289 = vmatpush.msra.mxu0 %v104
    %290 = vmatpush.msra.mxu0 %v102
    %291 = vmatpush.msra.mxu0 %v100
    %292 = vmatpush.msra.mxu0 %v98
    %293 = vmatpush.msra.mxu0 %v96
    %294 = vmatpush.msra.mxu0 %v94
    %295 = vmatpush.msra.mxu0 %v92
    %296 = vmatpush.msra.mxu0 %v90
    %297 = vmatpush.msra.mxu0 %v88
    %298 = vmatpush.msra.mxu0 %v86
    %299 = vmatpush.msra.mxu0 %v84
    %300 = vmatpush.msra.mxu0 %v82
    %301 = vmatpush.msra.mxu0 %v80
    %302 = vmatmul.f32.gmra.mxu0 %v241
    %v303 = vpop.f32.mrf.mxu0
    %v304 = vadd.f32 %v237, %v303
    %305 = vdwg.mxu0
    %306 = vmatpush.msra.mxu0 0.0
    %307 = vmatpush.msra.mxu0 0.0
    %308 = vmatpush.msra.mxu0 0.0
    %309 = vmatpush.msra.mxu0 0.0
    %310 = vmatpush.msra.mxu0 0.0
    %311 = vmatpush.msra.mxu0 0.0
    %312 = vmatpush.msra.mxu0 0.0
    %313 = vmatpush.msra.mxu0 0.0
    %314 = vmatpush.msra.mxu0 0.0
    %315 = vmatpush.msra.mxu0 0.0
    %316 = vmatpush.msra.mxu0 0.0
    %317 = vmatpush.msra.mxu0 0.0
    %318 = vmatpush.msra.mxu0 0.0
    %319 = vmatpush.msra.mxu0 0.0
    %320 = vmatpush.msra.mxu0 %v114
    %321 = vmatpush.msra.mxu0 %v112
    %322 = vmatmul.f32.gmra.mxu0 %v244
    %v323 = vpop.f32.mrf.mxu0
    %v324 = vadd.f32 %v304, %v323
    %325 = vdwg.mxu0
    %v326 = vld [vmem:[%s3] sm:$0x3]
    %v328 = vperm.slane %v326, 0
    %v329 = vperm.slane %v326, 1
    %v332 = vadd.f32 %v284, %v328
    %v333 = vadd.f32 %v324, %v329
    %v334 = vsub.f32 0.0, %v332
    %v335 = vsub.f32 0.0, %v333
    %v336 = vmul.f32 %v334, 1.442695
    %v337 = vpow.pop %v336
    %v338 = vmul.f32 %v335, 1.442695
    %v339 = vpow.pop %v338
    %v340 = vadd.f32 %v337, 1.0
    %v341 = vadd.f32 %v339, 1.0
    %v342 = vrcp.pop %v340
    %v343 = vrcp.pop %v341
    %v344 = vadd.f32 %v342, 1.0
    %v345 = vadd.f32 %v343, 1.0
    %v346 = vld [vmem:[#allocation2] sm:$0xf]
    %v347 = vld [vmem:[#allocation2 + $0x4] sm:$0xf]
    %v348 = vld [vmem:[#allocation2 + $0x8] sm:$0xf]
    %v349 = vld [vmem:[#allocation2 + $0xc] sm:$0xf]
    %v352 = vrot.slane %v345, 6
    %vm353 = vcmask 1041408
    %v354 = vsel %vm353, %v344, %v352
    %v356 = vmul.f32 %v346, %v354
    %v357 = vmul.f32 %v347, %v354
    %v358 = vmul.f32 %v348, %v354
    %v359 = vmul.f32 %v349, %v354
    %vm360 = vcmask 125954
    %vm361 = vmor %vm360, %vm353
    %362 = vst.msk [vmem:[#allocation8] sm:$0xf] %vm361, %v356
    %363 = vst.msk [vmem:[#allocation8 + $0x4] sm:$0xf] %vm361, %v357
    %364 = vst.msk [vmem:[#allocation8 + $0x8] sm:$0xf] %vm361, %v358
    %365 = vst.msk [vmem:[#allocation8 + $0xc] sm:$0xf] %vm361, %v359
    // Predicated region
    $region30: #{tpu_custom_call.1} parent=1 // pred_check
      _
    $region31: #{tpu_custom_call.1} parent=1 // pred_check_branch
      %367 = sbr.rel (0) target = $region33
    $region32: #{tpu_custom_call.1} parent=1 // pred_region
      %369 = vsyncadd [#allocation4], 0
      %s370 = sshll.u32 [#allocation8], 4
      %s371 = int_to_ptr.vmem [resolvable:$true] %s370
      %s372 = sshll.u32 %s4, 4
      %s373 = int_to_ptr.hbm [resolvable:$true] %s372
      %378 = dma.vmem_to_hbm [thread:$0]  %s371, 256, %s373, [#allocation4], 64, 64, 4
    $region33: #{tpu_custom_call.1} parent=1 // pred_fallthru
      _
    // Predicated region
    $region34: #{tpu_custom_call.1} parent=1 // pred_check
      _
    $region35: #{tpu_custom_call.1} parent=1 // pred_check_branch
      %380 = sbr.rel (0) target = $region37
    $region36: #{tpu_custom_call.1} parent=1 // pred_region
      %382 = dma.done [#allocation4], 256
    $region37: #{tpu_custom_call.1} parent=1 // pred_fallthru
      _
    %383 = vsyncpa [#allocation3], 1
    %384 = vsyncpa [#allocation6], 1
    %385 = vsyncpa [#allocation4], 1

</llo_original>
